<compile_context>
chip_gen: v7x
topology: tpu7x:2x2x1
jax: 0.10.0
libtpu: 0.0.40
codegen_flags: <defaults>
</compile_context>

<pallas_src>
import functools

import jax
import jax.numpy as jnp
from jax.experimental import pallas as pl
from jax.experimental.pallas import tpu as pltpu


_LANE = 128
_SUBLANE = 8

# Per-operand block byte budgets (counted at 4 B/elem so f32 temporaries are
# covered even for narrow input dtypes).
#   - simple reduce kernels keep only (rows,1)/(1,cols) stats live -> big blocks
#   - the MXU group kernel materializes matmul results (~3-4 block-sized temps)
_REDUCE_BLOCK_BYTES = 8 * 1024 * 1024
_MXU_BLOCK_BYTES = 4 * 1024 * 1024
# Above v5e/v6e scoped defaults (16/32 MiB), below v7x physical 64 MiB, with
# headroom for double-buffered in/out plus in-kernel f32 temporaries.
_VMEM_LIMIT_BYTES = 56 * 1024 * 1024

# Target number of grid steps so both v7x TensorCores get work.
_MIN_GRID_BLOCKS = 8


def _cdiv(a, b):
    return -(-a // b)


def _round_up(x, m):
    return ((x + m - 1) // m) * m


def _sublane_mult(dtype):
    """Packed-sublane multiple: 8 for 32-bit, 16 for 16-bit, 32 for 8-bit."""
    itemsize = jnp.dtype(dtype).itemsize
    return max(_SUBLANE, (4 // max(1, itemsize)) * _SUBLANE)


def _pick_tile(total, align, budget_elems, min_blocks):
    """Tile along one axis: multiple of `align`, within the byte budget, with at
    least `min_blocks` grid steps when possible, never far beyond the axis."""
    t_budget = max(align, (budget_elems // align) * align)
    t_split = _round_up(_cdiv(total, max(1, min_blocks)), align)
    t = max(align, min(t_budget, t_split))
    t = min(t, _round_up(total, align))
    return t


# ---------------------------------------------------------------------------
# Kernel A: channels on LANES — block (tm, C), reduction over the lane axis.
# ---------------------------------------------------------------------------
def _ln_lanes_kernel(x_ref, w_ref, b_ref, o_ref, *, c, eps):
    x = x_ref[...].astype(jnp.float32)                  # (tm, C)
    inv_c = 1.0 / c
    s1 = jnp.sum(x, axis=-1, keepdims=True)
    s2 = jnp.sum(x * x, axis=-1, keepdims=True)
    mean = s1 * inv_c
    var = s2 * inv_c - mean * mean                      # biased variance (F.layer_norm)
    y = (x - mean) * jax.lax.rsqrt(var + eps)
    w = w_ref[...].astype(jnp.float32)                  # (1, C)
    b = b_ref[...].astype(jnp.float32)                  # (1, C)
    o_ref[...] = (y * w + b).astype(o_ref.dtype)


# ---------------------------------------------------------------------------
# Kernel B: channels on SUBLANES — block (C, tw), reduction over sublanes.
# ---------------------------------------------------------------------------
def _ln_sublanes_kernel(x_ref, w_ref, b_ref, o_ref, *, c, eps):
    x = x_ref[...].astype(jnp.float32)                  # (C, tw)
    inv_c = 1.0 / c
    s1 = jnp.sum(x, axis=0, keepdims=True)
    s2 = jnp.sum(x * x, axis=0, keepdims=True)
    mean = s1 * inv_c
    var = s2 * inv_c - mean * mean
    y = (x - mean) * jax.lax.rsqrt(var + eps)
    w = w_ref[...].astype(jnp.float32)                  # (C, 1)
    b = b_ref[...].astype(jnp.float32)                  # (C, 1)
    o_ref[...] = (y * w + b).astype(o_ref.dtype)


# ---------------------------------------------------------------------------
# Kernel C: small C on lanes, 128/C pixels per vreg row — block (tm, 128).
# Group sums via MXU matmul against a 128x128 block-diagonal ones matrix.
# ---------------------------------------------------------------------------
def _ln_groups_kernel(x_ref, g_ref, w_ref, b_ref, o_ref, *, c, eps):
    x = x_ref[...].astype(jnp.float32)                  # (tm, 128)
    g = g_ref[...]                                      # (128, 128) block-diag ones
    inv_c = 1.0 / c
    s1 = jnp.dot(x, g, preferred_element_type=jnp.float32)        # per-pixel sums
    s2 = jnp.dot(x * x, g, preferred_element_type=jnp.float32)    # per-pixel sumsq
    mean = s1 * inv_c
    var = s2 * inv_c - mean * mean
    y = (x - mean) * jax.lax.rsqrt(var + eps)
    w = w_ref[...].astype(jnp.float32)                  # (1, 128) = weight tiled 128/C times
    b = b_ref[...].astype(jnp.float32)                  # (1, 128)
    o_ref[...] = (y * w + b).astype(o_ref.dtype)


# ---------------------------------------------------------------------------
# channels_last: x (..., C), normalize over C
# ---------------------------------------------------------------------------
def layer_norm_channels_last(x, weight, bias, eps=1e-6):
    """Matches F.layer_norm(x, (C,), weight, bias, eps) on a (..., C) tensor."""
    orig_shape = x.shape
    C = orig_shape[-1]
    compiler_params = pltpu.CompilerParams(
        dimension_semantics=("parallel",), vmem_limit_bytes=_VMEM_LIMIT_BYTES)

    if C < _LANE and _LANE % C == 0:
        # ---- small C: lane-dense (M, 128) view, MXU block-diagonal reduce ----
        total = 1
        for d in orig_shape:
            total *= d
        Mp = _cdiv(total, _LANE)
        pad = Mp * _LANE - total
        flat = x.reshape(-1)
        if pad:
            # Rare ragged-total case: one small contiguous pad pass (pad length is
            # a multiple of C, so pad pixels are whole, zero-filled groups).
            flat = jnp.pad(flat, (0, pad))
        xm = flat.reshape(Mp, _LANE)                    # free view when pad == 0

        sub = _sublane_mult(x.dtype)
        budget_rows = _MXU_BLOCK_BYTES // (_LANE * 4)
        tm = _pick_tile(Mp, sub, budget_rows, _MIN_GRID_BLOCKS)

        idx = jnp.arange(_LANE)
        g = (idx[:, None] // C == idx[None, :] // C).astype(jnp.float32)
        reps = _LANE // C
        w_t = jnp.tile(weight.reshape(-1), reps).reshape(1, _LANE)
        b_t = jnp.tile(bias.reshape(-1), reps).reshape(1, _LANE)

        out = pl.pallas_call(
            functools.partial(_ln_groups_kernel, c=C, eps=eps),
            out_shape=jax.ShapeDtypeStruct((Mp, _LANE), x.dtype),
            grid_spec=pltpu.PrefetchScalarGridSpec(
                num_scalar_prefetch=0,
                grid=(_cdiv(Mp, tm),),
                in_specs=[
                    pl.BlockSpec((tm, _LANE), lambda i: (i, 0)),
                    pl.BlockSpec((_LANE, _LANE), lambda i: (0, 0)),
                    pl.BlockSpec((1, _LANE), lambda i: (0, 0)),
                    pl.BlockSpec((1, _LANE), lambda i: (0, 0)),
                ],
                out_specs=pl.BlockSpec((tm, _LANE), lambda i: (i, 0)),
            ),
            compiler_params=compiler_params,
        )(xm, g, w_t, b_t)
        out_flat = out.reshape(-1)
        if pad:
            out_flat = out_flat[:total]
        return out_flat.reshape(orig_shape)

    # ---- generic path: channels on lanes, natural (N, C) layout ----
    x2 = x.reshape(-1, C)
    N = x2.shape[0]
    sub = _sublane_mult(x.dtype)
    c_vmem = _round_up(C, _LANE)                        # lane padding in VMEM
    budget_rows = _REDUCE_BLOCK_BYTES // (c_vmem * 4)
    tm = _pick_tile(N, sub, budget_rows, _MIN_GRID_BLOCKS)

    out = pl.pallas_call(
        functools.partial(_ln_lanes_kernel, c=C, eps=eps),
        out_shape=jax.ShapeDtypeStruct((N, C), x.dtype),
        grid_spec=pltpu.PrefetchScalarGridSpec(
            num_scalar_prefetch=0,
            grid=(_cdiv(N, tm),),
            in_specs=[
                pl.BlockSpec((tm, C), lambda i: (i, 0)),
                pl.BlockSpec((1, C), lambda i: (0, 0)),
                pl.BlockSpec((1, C), lambda i: (0, 0)),
            ],
            out_specs=pl.BlockSpec((tm, C), lambda i: (i, 0)),
        ),
        compiler_params=compiler_params,
    )(x2, weight.reshape(1, C), bias.reshape(1, C))
    return out.reshape(orig_shape)


# ---------------------------------------------------------------------------
# channels_first: x (B, C, H, W), normalize over C
# ---------------------------------------------------------------------------
def layer_norm_channels_first(x, weight, bias, eps=1e-6):
    """The PyTorch channels_first branch: per-(b,h,w) normalization over C."""
    B, C, H, W = x.shape
    HW = H * W
    x3 = x.reshape(B, C, HW)                            # free view: lanes carry HW

    # Derate the budget for sublane padding when C is below the packed multiple.
    c_vmem = _round_up(C, _sublane_mult(x.dtype))
    budget_cols = _REDUCE_BLOCK_BYTES // (c_vmem * 4)
    min_blocks = max(1, _cdiv(_MIN_GRID_BLOCKS, B))     # B * steps >= 8 when possible
    tw = _pick_tile(HW, _LANE, budget_cols, min_blocks)

    out = pl.pallas_call(
        functools.partial(_ln_sublanes_kernel, c=C, eps=eps),
        out_shape=jax.ShapeDtypeStruct((B, C, HW), x.dtype),
        grid_spec=pltpu.PrefetchScalarGridSpec(
            num_scalar_prefetch=0,
            grid=(B, _cdiv(HW, tw)),
            in_specs=[
                pl.BlockSpec((pl.Squeezed(), C, tw), lambda b, j: (b, 0, j)),
                pl.BlockSpec((C, 1), lambda b, j: (0, 0)),
                pl.BlockSpec((C, 1), lambda b, j: (0, 0)),
            ],
            out_specs=pl.BlockSpec((pl.Squeezed(), C, tw), lambda b, j: (b, 0, j)),
        ),
        compiler_params=pltpu.CompilerParams(
            dimension_semantics=("parallel", "parallel"),
            vmem_limit_bytes=_VMEM_LIMIT_BYTES),
    )(x3, weight.reshape(C, 1), bias.reshape(C, 1))
    return out.reshape(B, C, H, W)


# ---------------------------------------------------------------------------
# Pure-jnp references for sanity checks
# ---------------------------------------------------------------------------
def _ref_channels_last(x, w, b, eps):
    u = jnp.mean(x, axis=-1, keepdims=True)
    s = jnp.mean((x - u) ** 2, axis=-1, keepdims=True)
    return (x - u) / jnp.sqrt(s + eps) * w + b


def _ref_channels_first(x, w, b, eps):
    u = jnp.mean(x, axis=1, keepdims=True)
    s = jnp.mean((x - u) ** 2, axis=1, keepdims=True)
    xn = (x - u) / jnp.sqrt(s + eps)
    return w[None, :, None, None] * xn + b[None, :, None, None]


if __name__ == "__main__":
    key = jax.random.PRNGKey(0)
    eps = 1e-6

    C = 4
    weight = jnp.ones((C,), dtype=jnp.float32)   # exactly module __init__
    bias = jnp.zeros((C,), dtype=jnp.float32)
    k1, k2, k3, k4, k5 = jax.random.split(key, 5)

    # ------- channels_first, C=4, NCHW (2, 4, 16, 16) -------
    x_cf = jax.random.normal(k1, (2, C, 16, 16), dtype=jnp.float32)
    y_cf = jax.block_until_ready(layer_norm_channels_first(x_cf, weight, bias, eps))
    assert jnp.max(jnp.abs(y_cf - _ref_channels_first(x_cf, weight, bias, eps))) < 1e-4

    # ------- channels_last, C=4, NHWC (2, 16, 16, 4): lane-dense MXU group path -------
    x_cl = jax.random.normal(k2, (2, 16, 16, C), dtype=jnp.float32)
    y_cl = jax.block_until_ready(layer_norm_channels_last(x_cl, weight, bias, eps))
    assert jnp.max(jnp.abs(y_cl - _ref_channels_last(x_cl, weight, bias, eps))) < 1e-4

    # ------- channels_first with non-lane-aligned spatial (ragged edge block) -------
    x_cf2 = jax.random.normal(k3, (2, C, 17, 19), dtype=jnp.float32)
    y_cf2 = jax.block_until_ready(layer_norm_channels_first(x_cf2, weight, bias, eps))
    assert jnp.max(jnp.abs(y_cf2 - _ref_channels_first(x_cf2, weight, bias, eps))) < 1e-4

    # ------- channels_last, lane-aligned C=256 (lane path, ragged row block) -------
    C2 = 256
    w2 = jnp.ones((C2,), dtype=jnp.float32)
    b2 = jnp.zeros((C2,), dtype=jnp.float32)
    x_cl2 = jax.random.normal(k4, (2, 7, 9, C2), dtype=jnp.float32)
    y_cl2 = jax.block_until_ready(layer_norm_channels_last(x_cl2, w2, b2, eps))
    assert jnp.max(jnp.abs(y_cl2 - _ref_channels_last(x_cl2, w2, b2, eps))) < 1e-4

    # ------- channels_last, C=4 with total not a multiple of 128 (pad fallback) -------
    x_cl3 = jax.random.normal(k5, (2, 5, 5, C), dtype=jnp.float32)
    y_cl3 = jax.block_until_ready(layer_norm_channels_last(x_cl3, weight, bias, eps))
    assert jnp.max(jnp.abs(y_cl3 - _ref_channels_last(x_cl3, weight, bias, eps))) < 1e-4

    print("KERNEL_OK")
</pallas_src>

<mosaic_0001>
module attributes {stable_mosaic.version = 11 : i64} {
  func.func @_ln_sublanes_kernel(%arg0: i32, %arg1: i32, %arg2: memref<1x4x128xf32, #tpu.memory_space<vmem>>, %arg3: memref<4x1xf32, #tpu.memory_space<vmem>>, %arg4: memref<4x1xf32, #tpu.memory_space<vmem>>, %arg5: memref<1x4x128xf32, #tpu.memory_space<vmem>>) attributes {dimension_semantics = [#tpu.dimension_semantics<parallel>, #tpu.dimension_semantics<parallel>], iteration_bounds = array<i64: 2, 2>, scalar_prefetch = 0 : i64, scratch_operands = 0 : i64, tpu.core_type = #tpu.core_type<tc>, window_params = [{transform_indices = @transform_0, window_bounds = array<i64: 1, 4, 128>}, {pipeline_mode = #tpu.pipeline_mode<synchronous>, transform_indices = @transform_1, window_bounds = array<i64: 4, 1>}, {pipeline_mode = #tpu.pipeline_mode<synchronous>, transform_indices = @transform_2, window_bounds = array<i64: 4, 1>}, {transform_indices = @transform_3, window_bounds = array<i64: 1, 4, 128>}]} {
    %c0 = arith.constant 0 : index
    %c0_0 = arith.constant 0 : index
    %c0_1 = arith.constant 0 : index
    %0 = vector.load %arg2[%c0, %c0_0, %c0_1] : memref<1x4x128xf32, #tpu.memory_space<vmem>>, vector<1x4x128xf32>
    %1 = vector.shape_cast %0 : vector<1x4x128xf32> to vector<4x128xf32>
    %cst = arith.constant dense<0.000000e+00> : vector<128xf32>
    %2 = vector.multi_reduction <add>, %1, %cst [0] : vector<4x128xf32> to vector<128xf32>
    %3 = vector.shape_cast %2 : vector<128xf32> to vector<1x128xf32>
    %4 = arith.mulf %1, %1 : vector<4x128xf32>
    %cst_2 = arith.constant dense<0.000000e+00> : vector<128xf32>
    %5 = vector.multi_reduction <add>, %4, %cst_2 [0] : vector<4x128xf32> to vector<128xf32>
    %6 = vector.shape_cast %5 : vector<128xf32> to vector<1x128xf32>
    %cst_3 = arith.constant 2.500000e-01 : f32
    %7 = vector.broadcast %cst_3 : f32 to vector<1x128xf32>
    %8 = arith.mulf %3, %7 : vector<1x128xf32>
    %cst_4 = arith.constant 2.500000e-01 : f32
    %9 = vector.broadcast %cst_4 : f32 to vector<1x128xf32>
    %10 = arith.mulf %6, %9 : vector<1x128xf32>
    %11 = arith.mulf %8, %8 : vector<1x128xf32>
    %12 = arith.subf %10, %11 : vector<1x128xf32>
    %13 = vector.broadcast %8 : vector<1x128xf32> to vector<4x128xf32>
    %14 = arith.subf %1, %13 : vector<4x128xf32>
    %cst_5 = arith.constant 9.99999997E-7 : f32
    %15 = vector.broadcast %cst_5 : f32 to vector<1x128xf32>
    %16 = arith.addf %12, %15 : vector<1x128xf32>
    %17 = math.rsqrt %16 : vector<1x128xf32>
    %18 = vector.broadcast %17 : vector<1x128xf32> to vector<4x128xf32>
    %19 = arith.mulf %14, %18 : vector<4x128xf32>
    %c0_6 = arith.constant 0 : index
    %c0_7 = arith.constant 0 : index
    %20 = vector.load %arg3[%c0_6, %c0_7] : memref<4x1xf32, #tpu.memory_space<vmem>>, vector<4x1xf32>
    %c0_8 = arith.constant 0 : index
    %c0_9 = arith.constant 0 : index
    %21 = vector.load %arg4[%c0_8, %c0_9] : memref<4x1xf32, #tpu.memory_space<vmem>>, vector<4x1xf32>
    %22 = vector.broadcast %20 : vector<4x1xf32> to vector<4x128xf32>
    %23 = arith.mulf %19, %22 : vector<4x128xf32>
    %24 = vector.broadcast %21 : vector<4x1xf32> to vector<4x128xf32>
    %25 = arith.addf %23, %24 : vector<4x128xf32>
    %c0_10 = arith.constant 0 : index
    %c0_11 = arith.constant 0 : index
    %c0_12 = arith.constant 0 : index
    %26 = vector.load %arg5[%c0_10, %c0_11, %c0_12] : memref<1x4x128xf32, #tpu.memory_space<vmem>>, vector<1x4x128xf32>
    %27 = vector.shape_cast %26 : vector<1x4x128xf32> to vector<4x128xf32>
    %28 = vector.shape_cast %25 : vector<4x128xf32> to vector<1x4x128xf32>
    tpu.vector_store %arg5[%c0_10, %c0_11, %c0_12], %28 {strides = array<i32>} : memref<1x4x128xf32, #tpu.memory_space<vmem>>, vector<1x4x128xf32>,
    return
  }
  func.func @transform_0(%arg0: i32, %arg1: i32) -> (i32, i32, i32) {
    %c0_i32 = arith.constant 0 : i32
    %c0_i32_0 = arith.constant 0 : i32
    return %arg0, %c0_i32, %arg1 : i32, i32, i32
  }
  func.func @transform_1(%arg0: i32, %arg1: i32) -> (i32, i32) {
    %c0_i32 = arith.constant 0 : i32
    %c0_i32_0 = arith.constant 0 : i32
    %c0_i32_1 = arith.constant 0 : i32
    return %c0_i32, %c0_i32_0 : i32, i32
  }
  func.func @transform_2(%arg0: i32, %arg1: i32) -> (i32, i32) {
    %c0_i32 = arith.constant 0 : i32
    %c0_i32_0 = arith.constant 0 : i32
    %c0_i32_1 = arith.constant 0 : i32
    return %c0_i32, %c0_i32_0 : i32, i32
  }
  func.func @transform_3(%arg0: i32, %arg1: i32) -> (i32, i32, i32) {
    %c0_i32 = arith.constant 0 : i32
    %c0_i32_0 = arith.constant 0 : i32
    return %arg0, %c0_i32, %arg1 : i32, i32, i32
  }
}

</mosaic_0001>

<llo_original>
// kernel: tpu_custom_call.1
$region0: #{tpu_custom_call.1}
  #allocation0 [shape = 'u32[]', space=smem, size = 0x4, offset = 0x4, fixed_abs, tag = 'smem constant byte address 0x4 - core index']
  #allocation1 [shape = 'u32[144,128]{1,0:T(1,128)}', space=vmem, size = 0x12000, scoped, tag = 'internal scratch']
  %s0 = inlined_call_operand.hbm [shape: f32[2,4,256], index: 0, kind: input, shape index: {}]
  %s1 = inlined_call_operand.vmem [shape: f32[4,1], index: 1, kind: input, shape index: {}]
  %s2 = inlined_call_operand.vmem [shape: f32[4,1], index: 2, kind: input, shape index: {}]
  %s3 = inlined_call_operand.hbm [shape: f32[2,4,256], index: 3, kind: output, shape index: {}]
  %s4 = sld [smem:[#allocation0]]
  $region49: #{tpu_custom_call.1} parent=0
    _
  %s6 = ssub.s32 1, %s4
  %s7 = scalar_select 0, %s6, %s4
  $region1: #{tpu_custom_call.1} parent=0
    #allocation2 [shape = 'u8[4096]{0}', space=vmem, size = 0x1000, scoped, tag = 'input window, operand 0']
    #allocation3 [shape = 's32[2]{0}', space=sflag, size = 0x8, scoped, tag = 'scoped memory for tpu_custom_call.1']
    #allocation4 [shape = 's32[2]{0}', space=sflag, size = 0x8, scoped, tag = 'scoped memory for tpu_custom_call.1']
    #allocation5 [shape = 'u8[4096]{0}', space=vmem, size = 0x1000, scoped, tag = 'output window, operand 0']
    %8 = vsyncpa [#allocation3], 0
    %s9 = scalar_lea.sflag [#allocation3], 1
    %10 = vsyncpa %s9, 0
    %11 = vsyncpa [#allocation4], 0
    %s12 = scalar_lea.sflag [#allocation4], 1
    %13 = vsyncpa %s12, 0
    loop: start=0, step=1, limit=6
    $region2: #{tpu_custom_call.1} parent=1 // loop_pre_header
      _
    $region3: #{tpu_custom_call.1} parent=1 // loop_header
      %s15 = sphi 0, %s19
      %p16 = scmp.ge.s32.totalorder %s15, 6
      %s22 = sphi 0, %s34
      %s23 = sphi 0, %s30
      %s24 = sphi 0, %s22
      %s25 = sphi 0, %s23
      %s26 = sphi 0, %s24
      %s27 = sphi 0, %s25
      %s39 = sphi 0, %s41
      %s42 = sphi 0, %s39
      %s43 = sphi 0, %s42
      %s59 = sphi 0, %s43
      %s63 = sphi 0, %s63
      %s65 = sphi 0, %s63
      %s66 = sphi 0, %s65
      %s80 = sphi 0, %s66
      %s84 = sphi 0, %s84
      %s86 = sphi 0, %s84
      %s87 = sphi 0, %s86
      %s101 = sphi 0, %s87
      %s109 = sphi 0, %s111
      %s112 = sphi 0, %s109
      %s113 = sphi 0, %s112
      %s129 = sphi 0, %s113
    $region4: #{tpu_custom_call.1} parent=1 // loop_header_branch
      %18 = sbr.rel (%p16) target = $region8
    $region5: #{tpu_custom_call.1} parent=1 // loop_body
      %s20 = ssub.s32 %s15, 1
      %s21 = ssub.s32 %s15, 2
      %s28 = sadd.s32 1, %s23
      %p29 = scmp.ge.s32.totalorder %s28, 2
      %s30 = scalar_select %p29, 0, %s28
      %s31 = sadd.s32 1, %s22
      %s32 = scalar_select %p29, %s31, %s22
      %p33 = scmp.ge.s32.totalorder %s32, 2
      %s34 = scalar_select %p33, 0, %s32
      %s35 = ssub.s32 %s22, %s34
      %s36 = ssub.s32 %s23, %s30
      %s37 = sor.u32 %s35, %s36
      %p38 = scmp.eq.s32.totalorder %s37, 0
      %s40 = sadd.s32 %s39, 1
      %s41 = scalar_select %p38, %s39, %s40
      %p44 = pneg %p38
      %p45 = scmp.eq.s32.totalorder %s15, 3
      %p46 = por %p44, %p45
      %p47 = scmp.ne.s32.totalorder %s39, %s42
      %p48 = scmp.eq.s32.totalorder %s15, 0
      %p49 = por %p47, %p48
      %p50 = scmp.ne.s32.totalorder %s39, %s42
      %p51 = scmp.eq.s32.totalorder %s20, 3
      %p52 = por %p50, %p51
      %p53 = scmp.ne.s32.totalorder %s42, %s43
      %p54 = scmp.eq.s32.totalorder %s20, 0
      %p55 = por %p53, %p54
      %p56 = scmp.ne.s32.totalorder %s42, %s43
      %p57 = scmp.eq.s32.totalorder %s21, 3
      %p58 = por %p56, %p57
      %p60 = scmp.ne.s32.totalorder %s43, %s59
      %p61 = scmp.eq.s32.totalorder %s21, 0
      %p62 = por %p60, %p61
      %s64 = sadd.s32 %s63, 1
      %p67 = scmp.eq.s32.totalorder %s15, 3
      %p68 = scmp.ne.s32.totalorder %s63, %s65
      %p69 = scmp.eq.s32.totalorder %s15, 0
      %p70 = por %p68, %p69
      %p71 = scmp.ne.s32.totalorder %s63, %s65
      %p72 = scmp.eq.s32.totalorder %s20, 3
      %p73 = por %p71, %p72
      %p74 = scmp.ne.s32.totalorder %s65, %s66
      %p75 = scmp.eq.s32.totalorder %s20, 0
      %p76 = por %p74, %p75
      %p77 = scmp.ne.s32.totalorder %s65, %s66
      %p78 = scmp.eq.s32.totalorder %s21, 3
      %p79 = por %p77, %p78
      %p81 = scmp.ne.s32.totalorder %s66, %s80
      %p82 = scmp.eq.s32.totalorder %s21, 0
      %p83 = por %p81, %p82
      %s85 = sadd.s32 %s84, 1
      %p88 = scmp.eq.s32.totalorder %s15, 3
      %p89 = scmp.ne.s32.totalorder %s84, %s86
      %p90 = scmp.eq.s32.totalorder %s15, 0
      %p91 = por %p89, %p90
      %p92 = scmp.ne.s32.totalorder %s84, %s86
      %p93 = scmp.eq.s32.totalorder %s20, 3
      %p94 = por %p92, %p93
      %p95 = scmp.ne.s32.totalorder %s86, %s87
      %p96 = scmp.eq.s32.totalorder %s20, 0
      %p97 = por %p95, %p96
      %p98 = scmp.ne.s32.totalorder %s86, %s87
      %p99 = scmp.eq.s32.totalorder %s21, 3
      %p100 = por %p98, %p99
      %p102 = scmp.ne.s32.totalorder %s87, %s101
      %p103 = scmp.eq.s32.totalorder %s21, 0
      %p104 = por %p102, %p103
      %s105 = ssub.s32 %s22, %s34
      %s106 = ssub.s32 %s23, %s30
      %s107 = sor.u32 %s105, %s106
      %p108 = scmp.eq.s32.totalorder %s107, 0
      %s110 = sadd.s32 %s109, 1
      %s111 = scalar_select %p108, %s109, %s110
      %p114 = pneg %p108
      %p115 = scmp.eq.s32.totalorder %s15, 3
      %p116 = por %p114, %p115
      %p117 = scmp.ne.s32.totalorder %s109, %s112
      %p118 = scmp.eq.s32.totalorder %s15, 0
      %p119 = por %p117, %p118
      %p120 = scmp.ne.s32.totalorder %s109, %s112
      %p121 = scmp.eq.s32.totalorder %s20, 3
      %p122 = por %p120, %p121
      %p123 = scmp.ne.s32.totalorder %s112, %s113
      %p124 = scmp.eq.s32.totalorder %s20, 0
      %p125 = por %p123, %p124
      %p126 = scmp.ne.s32.totalorder %s112, %s113
      %p127 = scmp.eq.s32.totalorder %s21, 3
      %p128 = por %p126, %p127
      %p130 = scmp.ne.s32.totalorder %s113, %s129
      %p131 = scmp.eq.s32.totalorder %s21, 0
      %p132 = por %p130, %p131
      %p133 = scmp.le.s32.totalorder 1, %s15
      %p134 = scmp.lt.s32.totalorder %s15, 5
      %p135 = pnand %p133, %p134
      %p136 = pneg %p135
      // Predicated region
      $region9: #{tpu_custom_call.1} parent=5 // pred_check
        _
      $region10: #{tpu_custom_call.1} parent=5 // pred_check_branch
        %138 = sbr.rel (%p135) target = $region12
      $region11: #{tpu_custom_call.1} parent=5 // pred_region
        %s139 = ssub.s32 %s15, 1
        // Predicated region
        $region13: #{tpu_custom_call.1} parent=11 // pred_check
          %p140 = pneg %p76
        $region14: #{tpu_custom_call.1} parent=11 // pred_check_branch
          %142 = sbr.rel (%p140) target = $region16
        $region15: #{tpu_custom_call.1} parent=11 // pred_region
          _
        $region16: #{tpu_custom_call.1} parent=11 // pred_fallthru
          _
        // Predicated region
        $region17: #{tpu_custom_call.1} parent=11 // pred_check
          %p143 = pneg %p97
        $region18: #{tpu_custom_call.1} parent=11 // pred_check_branch
          %145 = sbr.rel (%p143) target = $region20
        $region19: #{tpu_custom_call.1} parent=11 // pred_region
          _
        $region20: #{tpu_custom_call.1} parent=11 // pred_fallthru
          _
      $region12: #{tpu_custom_call.1} parent=5 // pred_fallthru
        _
      %p146 = scmp.lt.s32.totalorder %s15, 4
      // Predicated region
      $region21: #{tpu_custom_call.1} parent=5 // pred_check
        %p147 = pneg %p146
      $region22: #{tpu_custom_call.1} parent=5 // pred_check_branch
        %149 = sbr.rel (%p147) target = $region24
      $region23: #{tpu_custom_call.1} parent=5 // pred_region
        // Predicated region
        $region25: #{tpu_custom_call.1} parent=23 // pred_check
          %p150 = pneg %p49
        $region26: #{tpu_custom_call.1} parent=23 // pred_check_branch
          %152 = sbr.rel (%p150) target = $region28
        $region27: #{tpu_custom_call.1} parent=23 // pred_region
          %s153 = sand.u32 %s39, 1
          %s154 = scalar_lea.sflag [#allocation3], %s153
          %s155 = sand.u32 %s39, 1
          %s156 = smul.addr %s155, 4
          %s157 = scalar_lea.vmem [#allocation2], %s156
          %s159 = ssub.s32 64, 64
          %160 = vsyncadd %s154, %s159
          %s161 = smul.addr %s22, 2
          %s162 = sadd.s32 %s23, %s161
          %s163 = smul.addr %s162, 64
          %s164 = scalar_lea.hbm %s0, %s163
          %s166 = sshll.u32 %s157, 4
          %s167 = int_to_ptr.vmem [resolvable:$true] %s166
          %169 = dma.hbm_to_vmem [thread:$0]  %s164, 64, %s167, %s154
        $region28: #{tpu_custom_call.1} parent=23 // pred_fallthru
          _
      $region24: #{tpu_custom_call.1} parent=5 // pred_fallthru
        _
      %p170 = scmp.le.s32.totalorder 1, %s15
      %p171 = scmp.lt.s32.totalorder %s15, 5
      %p172 = pnand %p170, %p171
      %p173 = pneg %p172
      // Predicated region
      $region29: #{tpu_custom_call.1} parent=5 // pred_check
        _
      $region30: #{tpu_custom_call.1} parent=5 // pred_check_branch
        %175 = sbr.rel (%p172) target = $region32
      $region31: #{tpu_custom_call.1} parent=5 // pred_region
        %s176 = ssub.s32 %s15, 1
        %s177 = sand.u32 %s42, 1
        %s178 = scalar_lea.sflag [#allocation3], %s177
        %s179 = sand.u32 %s42, 1
        %s180 = smul.addr %s179, 4
        %s181 = scalar_lea.vmem [#allocation2], %s180
        // Predicated region
        $region33: #{tpu_custom_call.1} parent=31 // pred_check
          %p182 = pneg %p55
        $region34: #{tpu_custom_call.1} parent=31 // pred_check_branch
          %184 = sbr.rel (%p182) target = $region36
        $region35: #{tpu_custom_call.1} parent=31 // pred_region
          %185 = dma.done %s178, 64
        $region36: #{tpu_custom_call.1} parent=31 // pred_fallthru
          _
        %s186 = sand.u32 %s42, 1
        %s187 = scalar_lea.sflag [#allocation3], %s186
        %s188 = sand.u32 %s42, 1
        %s189 = smul.addr %s188, 4
        %s190 = scalar_lea.vmem [#allocation2], %s189
        %p191 = pneg %p55
        %p192 = pneg %p52
        %p193 = pneg %p76
        %p194 = pneg %p73
        %p195 = pneg %p97
        %p196 = pneg %p94
        %p197 = pneg %p125
        %p198 = pneg %p122
        %s199 = sand.u32 %s112, 1
        %s200 = scalar_lea.sflag [#allocation4], %s199
        %s201 = sand.u32 %s112, 1
        %s202 = smul.addr %s201, 4
        %s203 = scalar_lea.vmem [#allocation5], %s202
        %v204 = vld [vmem:[%s181] sm:$0xf]
        %vm205 = vcmask 1043456
        %v206 = vsel %vm205, %v204, 0.0
        %v207 = vrot.slane %v206, 4
        %v208 = vadd.f32 %v206, %v207
        %v209 = vrot.slane %v208, 2
        %v210 = vadd.f32 %v208, %v209
        %v211 = vrot.slane %v210, 1
        %v212 = vadd.f32 %v210, %v211
        %v213 = vmul.f32 %v204, %v204
        %v214 = vsel %vm205, %v213, 0.0
        %v215 = vrot.slane %v214, 4
        %v216 = vadd.f32 %v214, %v215
        %v217 = vrot.slane %v216, 2
        %v218 = vadd.f32 %v216, %v217
        %v219 = vrot.slane %v218, 1
        %v220 = vadd.f32 %v218, %v219
        %v221 = vmul.f32 %v212, 0.25
        %v222 = vmul.f32 %v220, 0.25
        %v223 = vmul.f32 %v221, %v221
        %v224 = vsub.f32 %v222, %v223
        %v225 = vsub.f32 %v204, %v221
        %v226 = vadd.f32 %v224, 1e-06
        %v227 = vrsqrt.pop %v226
        %v228 = vmul.f32 %v225, %v227
        %v229 = vld [vmem:[%s1] sm:$0xf]
        %v230 = vld [vmem:[%s2] sm:$0xf]
        %232 = vset.pattern.permute.xlu0 0
        %233 = vperm.xlu0 %232, %v229
        %v234 = vpop.permute.xlu0 %233
        %v236 = vmul.f32 %v228, %v234
        %238 = vset.pattern.permute.xlu0 0
        %239 = vperm.xlu0 %238, %v230
        %v240 = vpop.permute.xlu0 %239
        %v242 = vadd.f32 %v236, %v240
        %243 = vst [vmem:[%s203] sm:$0xf] %v242
        %s244 = sand.u32 %s112, 1
        %s245 = scalar_lea.sflag [#allocation4], %s244
        %s246 = sand.u32 %s112, 1
        %s247 = smul.addr %s246, 4
        %s248 = scalar_lea.vmem [#allocation5], %s247
        // Predicated region
        $region37: #{tpu_custom_call.1} parent=31 // pred_check
          %p249 = pneg %p122
        $region38: #{tpu_custom_call.1} parent=31 // pred_check_branch
          %251 = sbr.rel (%p249) target = $region40
        $region39: #{tpu_custom_call.1} parent=31 // pred_region
          %s253 = ssub.s32 64, 64
          %254 = vsyncadd %s245, %s253
          %s255 = smul.addr %s24, 2
          %s256 = sadd.s32 %s25, %s255
          %s257 = smul.addr %s256, 64
          %s258 = scalar_lea.hbm %s3, %s257
          %s260 = sshll.u32 %s248, 4
          %s261 = int_to_ptr.vmem [resolvable:$true] %s260
          %263 = dma.vmem_to_hbm [thread:$0]  %s261, 64, %s258, %s245
        $region40: #{tpu_custom_call.1} parent=31 // pred_fallthru
          _
      $region32: #{tpu_custom_call.1} parent=5 // pred_fallthru
        _
      %p264 = scmp.le.s32.totalorder 2, %s15
      // Predicated region
      $region41: #{tpu_custom_call.1} parent=5 // pred_check
        %p265 = pneg %p264
      $region42: #{tpu_custom_call.1} parent=5 // pred_check_branch
        %267 = sbr.rel (%p265) target = $region44
      $region43: #{tpu_custom_call.1} parent=5 // pred_region
        %s268 = ssub.s32 %s15, 2
        // Predicated region
        $region45: #{tpu_custom_call.1} parent=43 // pred_check
          %p269 = pneg %p128
        $region46: #{tpu_custom_call.1} parent=43 // pred_check_branch
          %271 = sbr.rel (%p269) target = $region48
        $region47: #{tpu_custom_call.1} parent=43 // pred_region
          %s272 = sand.u32 %s113, 1
          %s273 = scalar_lea.sflag [#allocation4], %s272
          %s274 = sand.u32 %s113, 1
          %s275 = smul.addr %s274, 4
          %s276 = scalar_lea.vmem [#allocation5], %s275
          %277 = dma.done %s273, 64
        $region48: #{tpu_custom_call.1} parent=43 // pred_fallthru
          _
      $region44: #{tpu_custom_call.1} parent=5 // pred_fallthru
        _
    $region6: #{tpu_custom_call.1} parent=1 // loop_footer
      %s19 = sadd.s32 1, %s15
    $region7: #{tpu_custom_call.1} parent=1 // loop_footer_branch
      %14 = sbr.rel target = $region3
    $region8: #{tpu_custom_call.1} parent=1 // loop_exit
      _
    %278 = vsyncpa [#allocation3], 1
    %s279 = scalar_lea.sflag [#allocation3], 1
    %280 = vsyncpa %s279, 1
    %281 = vsyncpa [#allocation4], 1
    %s282 = scalar_lea.sflag [#allocation4], 1
    %283 = vsyncpa %s282, 1

</llo_original>
